<compile_context>
chip_gen: v7x
topology: tpu7x:2x2x1
jax: 0.10.0
libtpu: 0.0.40
codegen_flags: <defaults>
</compile_context>

<pallas_src>
import functools

import jax
import jax.numpy as jnp
from jax.experimental import pallas as pl
from jax.experimental.pallas import tpu as pltpu

KERNEL_SIZE = 3
SCALE = 0.5  # constructor arg `scale`, fixed deterministically in-script


# ---------------------------------------------------------------------------
# Pass 1: per-block partial sums (parallel grid); final reduction done in XLA.
# ---------------------------------------------------------------------------
def _stats_kernel(x_ref, sum_ref, sumsq_ref):
    x = x_ref[...].astype(jnp.float32)            # (B, H, W)
    sum_ref[...] = jnp.sum(x).reshape(1, 1, 1)
    sumsq_ref[...] = jnp.sum(x * x).reshape(1, 1, 1)


# ---------------------------------------------------------------------------
# Pass 2: in-VMEM reflect halo + factored sigmoid-weighted k*k accumulation.
# ---------------------------------------------------------------------------
def _filter_kernel(stats_ref, x_ref, o_ref, xp_ref, *, ksize, scale):
    ext = (ksize - 1) // 2
    B, H, W = x_ref.shape

    mean = stats_ref[0]                           # scalars from SMEM
    std = stats_ref[1]

    x = x_ref[...].astype(jnp.float32)            # (B, H, W)

    # ---- build the reflect-padded halo in VMEM scratch (no HBM round trip) --
    xp_ref[:, ext:ext + H, ext:ext + W] = x
    for e in range(1, ext + 1):
        # top / bottom reflected rows (interior columns only)
        xp_ref[:, ext - e:ext - e + 1, ext:ext + W] = x[:, e:e + 1, :]
        xp_ref[:, ext + H - 1 + e:ext + H + e, ext:ext + W] = x[:, H - 1 - e:H - e, :]
    for e in range(1, ext + 1):
        # left / right reflected columns (full padded height -> corners too)
        xp_ref[:, :, ext - e:ext - e + 1] = xp_ref[:, :, ext + e:ext + e + 1]
        xp_ref[:, :, ext + W - 1 + e:ext + W + e] = xp_ref[:, :, ext + W - 1 - e:ext + W - e]

    # ---- global sigmoid weight ---------------------------------------------
    weight = scale * jax.nn.sigmoid((x - mean) / (std + 1e-10))
    off_w = weight * (1.0 / (ksize * ksize - 1))

    # ---- factored taps: out = (1 - w - off_w) * x + off_w * window_sum -----
    win = None
    for i in range(ksize):                        # static unrolled taps
        for j in range(ksize):
            tap = xp_ref[:, i:i + H, j:j + W]
            win = tap if win is None else win + tap

    out = (1.0 - weight - off_w) * x + off_w * win
    o_ref[...] = out.astype(o_ref.dtype)


# ---------------------------------------------------------------------------
# Wrapper
# ---------------------------------------------------------------------------
def _block_planes(nc, h, w, itemsize, target_bytes=2 << 20):
    """Largest divisor of nc whose block stays under ~target_bytes (>= 1 plane)."""
    plane_bytes = max(1, h * w * itemsize)
    limit = max(target_bytes // plane_bytes, 1)
    best = 1
    for b in range(1, nc + 1):
        if nc % b == 0 and b <= limit:
            best = b
    return best


def weight_filter(residual, scale=SCALE, kernel_size=KERNEL_SIZE):
    N, C, H, W = residual.shape
    ext = (kernel_size - 1) // 2
    NC = N * C
    x = residual.reshape(NC, H, W)                # keep HBM I/O in input dtype

    B = _block_planes(NC, H, W, jnp.dtype(x.dtype).itemsize)
    G = NC // B
    # TODO(synk): if a single (H, W) plane ever exceeds the VMEM budget, split
    # planes into row strips with a 1-row overlapping halo via the index_map.

    cparams = pltpu.CompilerParams(
        dimension_semantics=("parallel",),
        vmem_limit_bytes=32 * 1024 * 1024,        # explicit: v5e default is 16 MiB
    )

    # ---- pass 1: per-block partial sums (parallel), reduce in XLA -----------
    psum, psumsq = pl.pallas_call(
        _stats_kernel,
        out_shape=(jax.ShapeDtypeStruct((G, 1, 1), jnp.float32),
                   jax.ShapeDtypeStruct((G, 1, 1), jnp.float32)),
        grid=(G,),
        in_specs=[pl.BlockSpec((B, H, W), lambda i: (i, 0, 0))],
        out_specs=(pl.BlockSpec((1, 1, 1), lambda i: (i, 0, 0)),
                   pl.BlockSpec((1, 1, 1), lambda i: (i, 0, 0))),
        compiler_params=cparams,
    )(x)

    n = jnp.float32(NC * H * W)
    s = jnp.sum(psum)
    ss = jnp.sum(psumsq)
    mean = s / n
    # torch.std default is the unbiased estimator (ddof = 1)
    var = (ss - n * mean * mean) / (n - 1.0)
    std = jnp.sqrt(jnp.maximum(var, 0.0))
    stats = jnp.stack([mean, std]).astype(jnp.float32)     # (2,) scalars -> SMEM

    # ---- pass 2: single-stream filter kernel (halo built in VMEM) -----------
    Hp, Wp = H + 2 * ext, W + 2 * ext
    # Note: W maps to the 128-lane axis; for toy W < 128 the output stores are
    # masked (acceptable here). For production shapes ensure W is >= 128-wide.
    out = pl.pallas_call(
        functools.partial(_filter_kernel, ksize=kernel_size, scale=scale),
        out_shape=jax.ShapeDtypeStruct((NC, H, W), residual.dtype),
        grid=(G,),
        in_specs=[
            pl.BlockSpec(memory_space=pltpu.MemorySpace.SMEM),   # (2,) mean/std
            pl.BlockSpec((B, H, W), lambda i: (i, 0, 0)),
        ],
        out_specs=pl.BlockSpec((B, H, W), lambda i: (i, 0, 0)),
        scratch_shapes=[pltpu.VMEM((B, Hp, Wp), jnp.float32)],
        compiler_params=cparams,
    )(stats, x)

    return out.reshape(N, C, H, W)


# ---------------------------------------------------------------------------
# Pure-JAX reference (mirrors the PyTorch forward exactly)
# ---------------------------------------------------------------------------
def weight_filter_ref(x, scale=SCALE, k=KERNEL_SIZE):
    ext = (k - 1) // 2
    mean = jnp.mean(x)
    std = jnp.std(x, ddof=1)
    weight = scale * jax.nn.sigmoid((x - mean) / (std + 1e-10))
    xp = jnp.pad(x, ((0, 0), (0, 0), (ext, ext), (ext, ext)), mode="reflect")
    H, W = x.shape[2], x.shape[3]
    out = jnp.zeros_like(x)
    for i in range(k):
        for j in range(k):
            sl = xp[:, :, i:i + H, j:j + W]
            if i == ext and j == ext:
                out = out + (1.0 - weight) * sl
            else:
                out = out + weight / (k * k - 1) * sl
    return out


if __name__ == "__main__":
    key = jax.random.PRNGKey(0)
    residual = jax.random.normal(key, (2, 4, 16, 16), dtype=jnp.float32)

    out = weight_filter(residual)
    out = jax.block_until_ready(out)

    ref = weight_filter_ref(residual)
    assert out.shape == residual.shape
    assert jnp.max(jnp.abs(out - ref)) < 1e-5, "mismatch vs reference"

    print("KERNEL_OK")
</pallas_src>

<mosaic_0001>
module attributes {stable_mosaic.version = 11 : i64} {
  func.func @_stats_kernel(%arg0: i32, %arg1: memref<8x16x16xf32, #tpu.memory_space<vmem>>, %arg2: memref<1x1x1xf32, #tpu.memory_space<vmem>>, %arg3: memref<1x1x1xf32, #tpu.memory_space<vmem>>) attributes {dimension_semantics = [#tpu.dimension_semantics<parallel>], iteration_bounds = array<i64: 1>, scalar_prefetch = 0 : i64, scratch_operands = 0 : i64, tpu.core_type = #tpu.core_type<tc>, window_params = [{transform_indices = @transform_0, window_bounds = array<i64: 8, 16, 16>}, {transform_indices = @transform_1, window_bounds = array<i64: 1, 1, 1>}, {transform_indices = @transform_2, window_bounds = array<i64: 1, 1, 1>}]} {
    %c0 = arith.constant 0 : index
    %c0_0 = arith.constant 0 : index
    %c0_1 = arith.constant 0 : index
    %0 = vector.load %arg1[%c0, %c0_0, %c0_1] : memref<8x16x16xf32, #tpu.memory_space<vmem>>, vector<8x16x16xf32>
    %1 = vector.shape_cast %0 : vector<8x16x16xf32> to vector<1x8x16x16xf32>
    %cst = arith.constant dense<0.000000e+00> : vector<1xf32>
    %2 = vector.multi_reduction <add>, %1, %cst [1, 2, 3] : vector<1x8x16x16xf32> to vector<1xf32>
    %3 = vector.shape_cast %2 : vector<1xf32> to vector<1x1x1x1xf32>
    %4 = vector.extract %3[0, 0, 0, 0] : f32 from vector<1x1x1x1xf32>
    %5 = vector.broadcast %4 : f32 to vector<1x1x1xf32>
    %c0_2 = arith.constant 0 : index
    %c0_3 = arith.constant 0 : index
    %c0_4 = arith.constant 0 : index
    %6 = vector.load %arg2[%c0_2, %c0_3, %c0_4] : memref<1x1x1xf32, #tpu.memory_space<vmem>>, vector<1x1x1xf32>
    tpu.vector_store %arg2[%c0_2, %c0_3, %c0_4], %5 {strides = array<i32>} : memref<1x1x1xf32, #tpu.memory_space<vmem>>, vector<1x1x1xf32>,
    %7 = arith.mulf %0, %0 : vector<8x16x16xf32>
    %8 = vector.shape_cast %7 : vector<8x16x16xf32> to vector<1x8x16x16xf32>
    %cst_5 = arith.constant dense<0.000000e+00> : vector<1xf32>
    %9 = vector.multi_reduction <add>, %8, %cst_5 [1, 2, 3] : vector<1x8x16x16xf32> to vector<1xf32>
    %10 = vector.shape_cast %9 : vector<1xf32> to vector<1x1x1x1xf32>
    %11 = vector.extract %10[0, 0, 0, 0] : f32 from vector<1x1x1x1xf32>
    %12 = vector.broadcast %11 : f32 to vector<1x1x1xf32>
    %c0_6 = arith.constant 0 : index
    %c0_7 = arith.constant 0 : index
    %c0_8 = arith.constant 0 : index
    %13 = vector.load %arg3[%c0_6, %c0_7, %c0_8] : memref<1x1x1xf32, #tpu.memory_space<vmem>>, vector<1x1x1xf32>
    tpu.vector_store %arg3[%c0_6, %c0_7, %c0_8], %12 {strides = array<i32>} : memref<1x1x1xf32, #tpu.memory_space<vmem>>, vector<1x1x1xf32>,
    return
  }
  func.func @transform_0(%arg0: i32) -> (i32, i32, i32) {
    %c0_i32 = arith.constant 0 : i32
    %c0_i32_0 = arith.constant 0 : i32
    %c0_i32_1 = arith.constant 0 : i32
    return %arg0, %c0_i32, %c0_i32_0 : i32, i32, i32
  }
  func.func @transform_1(%arg0: i32) -> (i32, i32, i32) {
    %c0_i32 = arith.constant 0 : i32
    %c0_i32_0 = arith.constant 0 : i32
    %c0_i32_1 = arith.constant 0 : i32
    return %arg0, %c0_i32, %c0_i32_0 : i32, i32, i32
  }
  func.func @transform_2(%arg0: i32) -> (i32, i32, i32) {
    %c0_i32 = arith.constant 0 : i32
    %c0_i32_0 = arith.constant 0 : i32
    %c0_i32_1 = arith.constant 0 : i32
    return %arg0, %c0_i32, %c0_i32_0 : i32, i32, i32
  }
}

</mosaic_0001>

<llo_original>
// kernel: tpu_custom_call.1
$region0: #{tpu_custom_call.1}
  #allocation0 [shape = 'u32[]', space=smem, size = 0x4, offset = 0x4, fixed_abs, tag = 'smem constant byte address 0x4 - core index']
  #allocation1 [shape = 'u32[144,128]{1,0:T(1,128)}', space=vmem, size = 0x12000, scoped, tag = 'internal scratch']
  %s0 = inlined_call_operand.hbm [shape: f32[8,16,16], index: 0, kind: input, shape index: {}]
  %s1 = inlined_call_operand.hbm [shape: f32[1,1,1], index: 1, kind: output, shape index: {0}]
  %s2 = inlined_call_operand.hbm [shape: f32[1,1,1], index: 2, kind: output, shape index: {1}]
  %3 = xla_tuple %s1, %s2
  %s4 = sld [smem:[#allocation0]]
  $region26: #{tpu_custom_call.1} parent=0
    _
  %s6 = ssub.s32 1, %s4
  %s7 = scalar_select 0, %s6, %s4
  $region1: #{tpu_custom_call.1} parent=0
    #allocation2 [shape = 'u8[65536]{0}', space=vmem, size = 0x10000, scoped, tag = 'input window, operand 0, single buffered']
    #allocation3 [shape = 's32[1]{0}', space=sflag, size = 0x4, scoped, tag = 'scoped memory for tpu_custom_call.1']
    #allocation4 [shape = 's32[1]{0}', space=sflag, size = 0x4, scoped, tag = 'scoped memory for tpu_custom_call.1']
    #allocation5 [shape = 'u8[512]{0}', space=vmem, size = 0x400, scoped, tag = 'output window, operand 0, single buffered']
    #allocation6 [shape = 'u8[512]{0}', space=vmem, size = 0x400, scoped, tag = 'output window, operand 1, single buffered']
    #allocation7 [shape = 's32[1]{0}', space=sflag, size = 0x4, scoped, tag = 'scoped memory for tpu_custom_call.1']
    %8 = vsyncpa [#allocation3], 0
    %9 = vsyncpa [#allocation4], 0
    %10 = vsyncpa [#allocation7], 0
    // Predicated region
    $region2: #{tpu_custom_call.1} parent=1 // pred_check
      _
    $region3: #{tpu_custom_call.1} parent=1 // pred_check_branch
      %12 = sbr.rel (0) target = $region5
    $region4: #{tpu_custom_call.1} parent=1 // pred_region
      %s14 = ssub.s32 2048, 2048
      %15 = vsyncadd [#allocation3], %s14
      %s16 = sshll.u32 [#allocation2], 4
      %s17 = int_to_ptr.vmem [resolvable:$true] %s16
      %22 = dma.hbm_to_vmem [thread:$0]  %s0, 2048, %s17, [#allocation3], 128, 128, 8
    $region5: #{tpu_custom_call.1} parent=1 // pred_fallthru
      _
    // Predicated region
    $region6: #{tpu_custom_call.1} parent=1 // pred_check
      _
    $region7: #{tpu_custom_call.1} parent=1 // pred_check_branch
      %24 = sbr.rel (0) target = $region9
    $region8: #{tpu_custom_call.1} parent=1 // pred_region
      %25 = dma.done [#allocation3], 2048
    $region9: #{tpu_custom_call.1} parent=1 // pred_fallthru
      _
    %v26 = vld [vmem:[#allocation2] sm:$0xff]
    %v27 = vld [vmem:[#allocation2 + $0x8] sm:$0xff]
    %v28 = vld [vmem:[#allocation2 + $0x10] sm:$0xff]
    %v29 = vld [vmem:[#allocation2 + $0x18] sm:$0xff]
    %v30 = vld [vmem:[#allocation2 + $0x20] sm:$0xff]
    %v31 = vld [vmem:[#allocation2 + $0x28] sm:$0xff]
    %v32 = vld [vmem:[#allocation2 + $0x30] sm:$0xff]
    %v33 = vld [vmem:[#allocation2 + $0x38] sm:$0xff]
    %v34 = vld [vmem:[#allocation2 + $0x40] sm:$0xff]
    %v35 = vld [vmem:[#allocation2 + $0x48] sm:$0xff]
    %v36 = vld [vmem:[#allocation2 + $0x50] sm:$0xff]
    %v37 = vld [vmem:[#allocation2 + $0x58] sm:$0xff]
    %v38 = vld [vmem:[#allocation2 + $0x60] sm:$0xff]
    %v39 = vld [vmem:[#allocation2 + $0x68] sm:$0xff]
    %v40 = vld [vmem:[#allocation2 + $0x70] sm:$0xff]
    %v41 = vld [vmem:[#allocation2 + $0x78] sm:$0xff]
    %vm42 = vcmask 130048
    %v43 = vsel %vm42, %v26, 0.0
    %v44 = vsel %vm42, %v27, 0.0
    %v45 = vadd.f32 %v43, %v44
    %v46 = vsel %vm42, %v28, 0.0
    %v47 = vadd.f32 %v45, %v46
    %v48 = vsel %vm42, %v29, 0.0
    %v49 = vadd.f32 %v47, %v48
    %v50 = vsel %vm42, %v30, 0.0
    %v51 = vadd.f32 %v49, %v50
    %v52 = vsel %vm42, %v31, 0.0
    %v53 = vadd.f32 %v51, %v52
    %v54 = vsel %vm42, %v32, 0.0
    %v55 = vadd.f32 %v53, %v54
    %v56 = vsel %vm42, %v33, 0.0
    %v57 = vadd.f32 %v55, %v56
    %v58 = vsel %vm42, %v34, 0.0
    %v59 = vadd.f32 %v57, %v58
    %v60 = vsel %vm42, %v35, 0.0
    %v61 = vadd.f32 %v59, %v60
    %v62 = vsel %vm42, %v36, 0.0
    %v63 = vadd.f32 %v61, %v62
    %v64 = vsel %vm42, %v37, 0.0
    %v65 = vadd.f32 %v63, %v64
    %v66 = vsel %vm42, %v38, 0.0
    %v67 = vadd.f32 %v65, %v66
    %v68 = vsel %vm42, %v39, 0.0
    %v69 = vadd.f32 %v67, %v68
    %v70 = vsel %vm42, %v40, 0.0
    %v71 = vadd.f32 %v69, %v70
    %v72 = vsel %vm42, %v41, 0.0
    %v73 = vadd.f32 %v71, %v72
    %74 = vadd.xlane.f32.xlu0 %v73
    %v75 = vpop.xlane.xlu0 %74
    %v76 = vrot.slane %v75, 4
    %v77 = vadd.f32 %v75, %v76
    %v78 = vrot.slane %v77, 2
    %v79 = vadd.f32 %v77, %v78
    %v80 = vrot.slane %v79, 1
    %v81 = vadd.f32 %v79, %v80
    %s82 = vtos %v81
    %v83 = vstv %s82
    %vm84 = vcmask 0
    %85 = vst.msk [vmem:[#allocation5] sm:$0x1] %vm84, %v83
    %v86 = vmul.f32 %v26, %v26
    %v87 = vmul.f32 %v27, %v27
    %v88 = vmul.f32 %v28, %v28
    %v89 = vmul.f32 %v29, %v29
    %v90 = vmul.f32 %v30, %v30
    %v91 = vmul.f32 %v31, %v31
    %v92 = vmul.f32 %v32, %v32
    %v93 = vmul.f32 %v33, %v33
    %v94 = vmul.f32 %v34, %v34
    %v95 = vmul.f32 %v35, %v35
    %v96 = vmul.f32 %v36, %v36
    %v97 = vmul.f32 %v37, %v37
    %v98 = vmul.f32 %v38, %v38
    %v99 = vmul.f32 %v39, %v39
    %v100 = vmul.f32 %v40, %v40
    %v101 = vmul.f32 %v41, %v41
    %v102 = vsel %vm42, %v86, 0.0
    %v103 = vsel %vm42, %v87, 0.0
    %v104 = vadd.f32 %v102, %v103
    %v105 = vsel %vm42, %v88, 0.0
    %v106 = vadd.f32 %v104, %v105
    %v107 = vsel %vm42, %v89, 0.0
    %v108 = vadd.f32 %v106, %v107
    %v109 = vsel %vm42, %v90, 0.0
    %v110 = vadd.f32 %v108, %v109
    %v111 = vsel %vm42, %v91, 0.0
    %v112 = vadd.f32 %v110, %v111
    %v113 = vsel %vm42, %v92, 0.0
    %v114 = vadd.f32 %v112, %v113
    %v115 = vsel %vm42, %v93, 0.0
    %v116 = vadd.f32 %v114, %v115
    %v117 = vsel %vm42, %v94, 0.0
    %v118 = vadd.f32 %v116, %v117
    %v119 = vsel %vm42, %v95, 0.0
    %v120 = vadd.f32 %v118, %v119
    %v121 = vsel %vm42, %v96, 0.0
    %v122 = vadd.f32 %v120, %v121
    %v123 = vsel %vm42, %v97, 0.0
    %v124 = vadd.f32 %v122, %v123
    %v125 = vsel %vm42, %v98, 0.0
    %v126 = vadd.f32 %v124, %v125
    %v127 = vsel %vm42, %v99, 0.0
    %v128 = vadd.f32 %v126, %v127
    %v129 = vsel %vm42, %v100, 0.0
    %v130 = vadd.f32 %v128, %v129
    %v131 = vsel %vm42, %v101, 0.0
    %v132 = vadd.f32 %v130, %v131
    %133 = vadd.xlane.f32.xlu0 %v132
    %v134 = vpop.xlane.xlu0 %133
    %v135 = vrot.slane %v134, 4
    %v136 = vadd.f32 %v134, %v135
    %v137 = vrot.slane %v136, 2
    %v138 = vadd.f32 %v136, %v137
    %v139 = vrot.slane %v138, 1
    %v140 = vadd.f32 %v138, %v139
    %s141 = vtos %v140
    %v142 = vstv %s141
    %143 = vst.msk [vmem:[#allocation6] sm:$0x1] %vm84, %v142
    // Predicated region
    $region10: #{tpu_custom_call.1} parent=1 // pred_check
      _
    $region11: #{tpu_custom_call.1} parent=1 // pred_check_branch
      %145 = sbr.rel (0) target = $region13
    $region12: #{tpu_custom_call.1} parent=1 // pred_region
      %s147 = ssub.s32 16, 16
      %148 = vsyncadd [#allocation4], %s147
      %s150 = sshll.u32 [#allocation5], 4
      %s151 = int_to_ptr.vmem [resolvable:$true] %s150
      %153 = dma.vmem_to_hbm [thread:$0]  %s151, 16, %s1, [#allocation4]
    $region13: #{tpu_custom_call.1} parent=1 // pred_fallthru
      _
    // Predicated region
    $region14: #{tpu_custom_call.1} parent=1 // pred_check
      _
    $region15: #{tpu_custom_call.1} parent=1 // pred_check_branch
      %155 = sbr.rel (0) target = $region17
    $region16: #{tpu_custom_call.1} parent=1 // pred_region
      %s157 = ssub.s32 16, 16
      %158 = vsyncadd [#allocation7], %s157
      %s160 = sshll.u32 [#allocation6], 4
      %s161 = int_to_ptr.vmem [resolvable:$true] %s160
      %163 = dma.vmem_to_hbm [thread:$0]  %s161, 16, %s2, [#allocation7]
    $region17: #{tpu_custom_call.1} parent=1 // pred_fallthru
      _
    // Predicated region
    $region18: #{tpu_custom_call.1} parent=1 // pred_check
      _
    $region19: #{tpu_custom_call.1} parent=1 // pred_check_branch
      %165 = sbr.rel (0) target = $region21
    $region20: #{tpu_custom_call.1} parent=1 // pred_region
      %166 = dma.done [#allocation4], 16
    $region21: #{tpu_custom_call.1} parent=1 // pred_fallthru
      _
    // Predicated region
    $region22: #{tpu_custom_call.1} parent=1 // pred_check
      _
    $region23: #{tpu_custom_call.1} parent=1 // pred_check_branch
      %168 = sbr.rel (0) target = $region25
    $region24: #{tpu_custom_call.1} parent=1 // pred_region
      %169 = dma.done [#allocation7], 16
    $region25: #{tpu_custom_call.1} parent=1 // pred_fallthru
      _
    %170 = vsyncpa [#allocation3], 1
    %171 = vsyncpa [#allocation4], 1
    %172 = vsyncpa [#allocation7], 1

</llo_original>
